<compile_context>
chip_gen: v7x
topology: tpu7x:2x2x1
jax: 0.10.0
libtpu: 0.0.40
codegen_flags: <defaults>
</compile_context>

<pallas_src>
import functools

import jax
import jax.numpy as jnp
import numpy as np
from jax.experimental import pallas as pl
from jax.experimental.pallas import tpu as pltpu

LANE = 128
SMOOTH = 1e-5


def _sublane_multiple(dtype):
    """Minimum sublane tiling multiple for a dtype (4B: 8, 2B: 16, 1B: 32)."""
    itemsize = jnp.dtype(dtype).itemsize
    return max(8, 32 // max(1, itemsize))


def _vmem_capacity_bytes():
    try:
        return int(pltpu.get_tpu_info().vmem_capacity_bytes)
    except Exception:
        return 64 * 1024 * 1024  # conservative (v7x-sized) fallback


def _make_dice_kernel(*, n_classes, n_sp, tr, chunk, num_t, total_tiles,
                      first_masked, apply_softmax):
    """Builds the per-(batch, half, tile) kernel.

    score_ref : (1, C, tr, 128)    native-dtype scores (all classes)
    label_ref : (1, 1, tr, 128)    native-dtype raw label map
    out_ref   : (1, C, 3, 8, 128)  f32 resident per-(batch, half) partials
                                   [intersect, y_sum, z_sum] per class
    """
    n_chunks = tr // chunk
    fold_groups = chunk // 8

    def fold(x):  # (chunk, LANE) -> (8, LANE), stays vreg-resident
        if fold_groups == 1:
            return x
        return x.reshape(fold_groups, 8, LANE).sum(axis=0)

    def kernel(score_ref, label_ref, out_ref):
        h = pl.program_id(1)
        t = pl.program_id(2)
        g = h * num_t + t  # logical global tile index (may exceed data tiles)

        @pl.when(t == 0)
        def _init():
            out_ref[...] = jnp.zeros_like(out_ref)

        def chunk_update(c, carry, masked):
            inter, ysum, zsum = carry
            off = c * chunk
            if not isinstance(off, int):
                off = pl.multiple_of(off, chunk)

            lab = label_ref[0, 0, pl.ds(off, chunk), :].astype(jnp.int32)

            valid = None
            if masked:
                # Mask positions beyond the true flattened spatial length
                # (covers lane/row padding, ragged tiles and clamped blocks).
                row = jax.lax.broadcasted_iota(jnp.int32, (chunk, LANE), 0)
                lane = jax.lax.broadcasted_iota(jnp.int32, (chunk, LANE), 1)
                pos = (g * tr + off + row) * LANE + lane
                valid = pos < n_sp
                lab = jnp.where(valid, lab, -1)  # -1 never matches a class id

            # Per-class (chunk, LANE) score chunks — loaded once each.
            s_list = [
                score_ref[0, i, pl.ds(off, chunk), :].astype(jnp.float32)
                for i in range(n_classes)
            ]
            if apply_softmax:
                # Fused channel softmax on pure (chunk, 128) vreg ops:
                # exp on the EUP, approx reciprocal on the EUP (VALU-free).
                m = s_list[0]
                for v in s_list[1:]:
                    m = jnp.maximum(m, v)
                e_list = [jnp.exp(v - m) for v in s_list]
                den = e_list[0]
                for v in e_list[1:]:
                    den = den + v
                inv = pl.reciprocal(den, approx=True)
                s_list = [e * inv for e in e_list]

            new_i, new_y, new_z = [], [], []
            # TODO(synk): for n_classes >> 16 switch this static class unroll
            # to a lax.fori_loop to bound vreg live ranges.
            for i in range(n_classes):
                s = s_list[i]
                if masked:
                    s = jnp.where(valid, s, 0.0)
                tgt = (lab == i).astype(jnp.float32)  # one-hot for class i
                new_i.append(inter[i] + fold(s * tgt))
                new_y.append(ysum[i] + fold(tgt))     # tgt * tgt == tgt
                new_z.append(zsum[i] + fold(s * s))
            return tuple(new_i), tuple(new_y), tuple(new_z)

        def accumulate(masked):
            z0 = tuple(jnp.zeros((8, LANE), jnp.float32)
                       for _ in range(n_classes))
            carry = (z0, z0, z0)
            if n_chunks == 1:
                carry = chunk_update(0, carry, masked)
            else:
                carry = jax.lax.fori_loop(
                    0, n_chunks,
                    lambda c, cr: chunk_update(c, cr, masked),
                    carry, unroll=min(4, n_chunks))
            inter, ysum, zsum = carry
            # One accumulate-store per term per class per tile.
            for i in range(n_classes):
                out_ref[0, i, 0] += inter[i]
                out_ref[0, i, 1] += ysum[i]
                out_ref[0, i, 2] += zsum[i]

        if first_masked >= total_tiles:
            accumulate(False)            # no padding anywhere: never mask
        elif first_masked == 0:
            accumulate(True)             # every tile touches padding
        else:
            # Interior tiles run unmasked; only ragged/padded tail tiles pay
            # the per-element select (keeps last tile fully masked, incl. z_sum).
            pl.when(g < first_masked)(lambda: accumulate(False))
            pl.when(g >= first_masked)(lambda: accumulate(True))

    return kernel


@functools.partial(jax.jit, static_argnames=("n_classes", "softmax"))
def dice_loss(inputs, target, n_classes, weight=None, softmax=False):
    """Matches DiceLoss.forward(inputs, target, weight, softmax)."""
    B, C, H, W = inputs.shape
    assert C == n_classes, "channel dim must equal n_classes"
    n_sp = H * W

    # Keep native dtypes (bf16 scores / int8 labels stream at native width).
    # (B, C, H, W) -> (B, C, H*W): copy-free.
    scores = inputs.reshape(B, C, n_sp)
    labels = target.reshape(B, n_sp)

    chunk = max(_sublane_multiple(scores.dtype), _sublane_multiple(labels.dtype))

    # Pad the flattened spatial dim to a multiple of chunk*128 lane-rows.
    # This is a copy ONLY when H*W is not already lane/sublane aligned.
    r = max(chunk, pl.cdiv(pl.cdiv(n_sp, LANE), chunk) * chunk)
    pad_to = r * LANE
    if pad_to != n_sp:
        scores = jnp.pad(scores, ((0, 0), (0, 0), (0, pad_to - n_sp)))
        labels = jnp.pad(labels, ((0, 0), (0, pad_to - n_sp)))
    scores = scores.reshape(B, C, r, LANE)
    labels = labels.reshape(B, 1, r, LANE)

    # Tile size: biggest score block within a VMEM budget derived from the
    # actual part (bigger blocks on 128 MiB v5e/v6e, v7x-safe 4 MiB blocks).
    big_vmem = _vmem_capacity_bytes() >= 100 * 1024 * 1024
    target_bytes = (8 if big_vmem else 4) * 1024 * 1024
    row_bytes = n_classes * LANE * scores.dtype.itemsize
    tr = target_bytes // row_bytes
    tr = max(chunk, min(2048, (tr // chunk) * chunk))
    tr = min(tr, r)                         # r is a multiple of chunk

    data_tiles = pl.cdiv(r, tr)
    nsplit = 2 if data_tiles >= 2 else 1    # use both v7x TCs even when B == 1
    num_t = pl.cdiv(data_tiles, nsplit)
    total_tiles = nsplit * num_t
    first_masked = n_sp // (tr * LANE)      # tiles >= this index touch padding

    kernel = _make_dice_kernel(
        n_classes=n_classes, n_sp=n_sp, tr=tr, chunk=chunk, num_t=num_t,
        total_tiles=total_tiles, first_masked=first_masked,
        apply_softmax=bool(softmax))

    # Clamp the block index so the rounded-up half split never starts an
    # out-of-bounds DMA; clamped duplicate tiles are masked out in-kernel.
    if total_tiles == data_tiles:
        g_of = lambda h, t: h * num_t + t
    else:
        g_of = lambda h, t: jnp.minimum(h * num_t + t, data_tiles - 1)

    score_map = lambda b, h, t: (b, 0, g_of(h, t), 0)
    label_map = lambda b, h, t: (b, 0, g_of(h, t), 0)
    out_map = lambda b, h, t: (b * nsplit + h, 0, 0, 0, 0)

    score_spec = pl.BlockSpec((1, n_classes, tr, LANE), score_map)
    if data_tiles >= 3:
        # Deep tile pipeline: triple-buffer the score stream (smooths exposed
        # DMA on v7x where compute-per-tile is close to DMA-per-tile).
        try:
            score_spec = pl.BlockSpec((1, n_classes, tr, LANE), score_map,
                                      pipeline_mode=pl.Buffered(3))
        except TypeError:
            pass

    partials = pl.pallas_call(
        kernel,
        out_shape=jax.ShapeDtypeStruct((B * nsplit, n_classes, 3, 8, LANE),
                                       jnp.float32),
        grid_spec=pltpu.PrefetchScalarGridSpec(
            num_scalar_prefetch=0,
            grid=(B, nsplit, num_t),
            in_specs=[score_spec,
                      pl.BlockSpec((1, 1, tr, LANE), label_map)],
            out_specs=pl.BlockSpec((1, n_classes, 3, 8, LANE), out_map),
        ),
        compiler_params=pltpu.CompilerParams(
            dimension_semantics=("parallel", "parallel", "arbitrary"),
            vmem_limit_bytes=(64 if big_vmem else 32) * 1024 * 1024,
        ),
    )(scores, labels)

    # Tiny JAX glue: combine partials, apply the dice formula per class.
    sums = jnp.sum(partials, axis=(0, 3, 4))           # (C, 3)
    intersect, y_sum, z_sum = sums[:, 0], sums[:, 1], sums[:, 2]
    dice = 1.0 - (2.0 * intersect + SMOOTH) / (z_sum + y_sum + SMOOTH)

    if weight is None:
        weight = [1.0] * n_classes
    w = jnp.asarray(weight, jnp.float32)
    # TODO(synk): the PyTorch module also builds a host-side class_wise_dice
    # list via .item(); only the scalar loss (the forward return) is computed.
    return jnp.sum(dice * w) / n_classes


def _reference_dice_loss(inputs, target, n_classes, weight=None, softmax=False):
    """Pure-JAX mirror of the PyTorch module, for a correctness check."""
    if softmax:
        inputs = jax.nn.softmax(inputs, axis=1)
    target_oh = (target[:, None, :, :] ==
                 jnp.arange(n_classes)[None, :, None, None]).astype(jnp.float32)
    if weight is None:
        weight = [1.0] * n_classes
    loss = 0.0
    for i in range(n_classes):
        score = inputs[:, i].astype(jnp.float32)
        t = target_oh[:, i]
        intersect = jnp.sum(score * t)
        y_sum = jnp.sum(t * t)
        z_sum = jnp.sum(score * score)
        dice = 1.0 - (2.0 * intersect + SMOOTH) / (z_sum + y_sum + SMOOTH)
        loss = loss + dice * weight[i]
    return loss / n_classes


if __name__ == "__main__":
    B, C, H, W = 2, 4, 16, 16   # small shapes: batch=2, n_classes=4, spatial=16
    key = jax.random.PRNGKey(0)
    k_in, k_tgt = jax.random.split(key)

    inputs = jax.random.uniform(k_in, (B, C, H, W), dtype=jnp.float32)
    target = jax.random.randint(k_tgt, (B, H, W), 0, C, dtype=jnp.int32)

    # softmax=False path
    loss = dice_loss(inputs, target, n_classes=C, weight=None, softmax=False)
    loss = jax.block_until_ready(loss)
    ref = _reference_dice_loss(inputs, target, n_classes=C, softmax=False)
    np.testing.assert_allclose(np.asarray(loss), np.asarray(ref),
                               rtol=1e-4, atol=1e-5)

    # fused in-kernel softmax path
    loss_sm = dice_loss(inputs, target, n_classes=C, weight=None, softmax=True)
    loss_sm = jax.block_until_ready(loss_sm)
    ref_sm = _reference_dice_loss(inputs, target, n_classes=C, softmax=True)
    np.testing.assert_allclose(np.asarray(loss_sm), np.asarray(ref_sm),
                               rtol=1e-3, atol=1e-5)

    print("KERNEL_OK")
</pallas_src>

<mosaic_0001>
module attributes {stable_mosaic.version = 11 : i64} {
  func.func @kernel(%arg0: i32, %arg1: i32, %arg2: i32, %arg3: memref<1x4x8x128xf32, #tpu.memory_space<vmem>>, %arg4: memref<1x1x8x128xi32, #tpu.memory_space<vmem>>, %arg5: memref<1x4x3x8x128xf32, #tpu.memory_space<vmem>>) attributes {dimension_semantics = [#tpu.dimension_semantics<parallel>, #tpu.dimension_semantics<parallel>, #tpu.dimension_semantics<arbitrary>], iteration_bounds = array<i64: 2, 1, 1>, scalar_prefetch = 0 : i64, scratch_operands = 0 : i64, tpu.core_type = #tpu.core_type<tc>, window_params = [{transform_indices = @transform_0, window_bounds = array<i64: 1, 4, 8, 128>}, {transform_indices = @transform_1, window_bounds = array<i64: 1, 1, 8, 128>}, {transform_indices = @transform_2, window_bounds = array<i64: 1, 4, 3, 8, 128>}]} {
    %c1_i32 = arith.constant 1 : i32
    %0 = arith.muli %arg1, %c1_i32 : i32
    %1 = arith.addi %0, %arg2 : i32
    %c0_i32 = arith.constant 0 : i32
    %2 = arith.cmpi eq, %arg2, %c0_i32 : i32
    %3 = arith.extui %2 : i1 to i32
    %c0_i32_0 = arith.constant 0 : i32
    %4 = arith.cmpi ne, %3, %c0_i32_0 : i32
    scf.if %4 {
      %cst_147 = arith.constant 0.000000e+00 : f32
      %148 = vector.broadcast %cst_147 : f32 to vector<1x4x3x8x128xf32>
      %c0_148 = arith.constant 0 : index
      %c0_149 = arith.constant 0 : index
      %c0_150 = arith.constant 0 : index
      %c0_151 = arith.constant 0 : index
      %c0_152 = arith.constant 0 : index
      %149 = vector.load %arg5[%c0_148, %c0_149, %c0_150, %c0_151, %c0_152] : memref<1x4x3x8x128xf32, #tpu.memory_space<vmem>>, vector<1x4x3x8x128xf32>
      tpu.vector_store %arg5[%c0_148, %c0_149, %c0_150, %c0_151, %c0_152], %148 {strides = array<i32>} : memref<1x4x3x8x128xf32, #tpu.memory_space<vmem>>, vector<1x4x3x8x128xf32>,
    } else {
    }
    %cst = arith.constant 0.000000e+00 : f32
    %5 = vector.broadcast %cst : f32 to vector<8x128xf32>
    %cst_1 = arith.constant 0.000000e+00 : f32
    %6 = vector.broadcast %cst_1 : f32 to vector<8x128xf32>
    %cst_2 = arith.constant 0.000000e+00 : f32
    %7 = vector.broadcast %cst_2 : f32 to vector<8x128xf32>
    %cst_3 = arith.constant 0.000000e+00 : f32
    %8 = vector.broadcast %cst_3 : f32 to vector<8x128xf32>
    %c0 = arith.constant 0 : index
    %c0_4 = arith.constant 0 : index
    %c0_5 = arith.constant 0 : index
    %c0_6 = arith.constant 0 : index
    %9 = vector.load %arg4[%c0, %c0_4, %c0_5, %c0_6] : memref<1x1x8x128xi32, #tpu.memory_space<vmem>>, vector<1x1x8x128xi32>
    %10 = vector.shape_cast %9 : vector<1x1x8x128xi32> to vector<8x128xi32>
    %11 = tpu.iota {dimensions = array<i32: 0>} : vector<8x128xi32>
    %12 = tpu.iota {dimensions = array<i32: 1>} : vector<8x128xi32>
    %c8_i32 = arith.constant 8 : i32
    %13 = arith.muli %1, %c8_i32 : i32
    %c0_i32_7 = arith.constant 0 : i32
    %14 = arith.addi %13, %c0_i32_7 : i32
    %15 = vector.broadcast %14 : i32 to vector<8x128xi32>
    %16 = arith.addi %15, %11 : vector<8x128xi32>
    %c128_i32 = arith.constant 128 : i32
    %17 = vector.broadcast %c128_i32 : i32 to vector<8x128xi32>
    %18 = arith.muli %16, %17 : vector<8x128xi32>
    %19 = arith.addi %18, %12 : vector<8x128xi32>
    %c256_i32 = arith.constant 256 : i32
    %20 = vector.broadcast %c256_i32 : i32 to vector<8x128xi32>
    %21 = arith.cmpi slt, %19, %20 : vector<8x128xi32>
    %c-1_i32 = arith.constant -1 : i32
    %22 = vector.broadcast %c-1_i32 : i32 to vector<8x128xi32>
    %23 = arith.select %21, %10, %22 : vector<8x128xi1>, vector<8x128xi32>
    %c0_8 = arith.constant 0 : index
    %c0_9 = arith.constant 0 : index
    %c0_10 = arith.constant 0 : index
    %c0_11 = arith.constant 0 : index
    %24 = vector.load %arg3[%c0_8, %c0_9, %c0_10, %c0_11] : memref<1x4x8x128xf32, #tpu.memory_space<vmem>>, vector<1x1x8x128xf32>
    %25 = vector.shape_cast %24 : vector<1x1x8x128xf32> to vector<8x128xf32>
    %c0_12 = arith.constant 0 : index
    %c1 = arith.constant 1 : index
    %c0_13 = arith.constant 0 : index
    %c0_14 = arith.constant 0 : index
    %26 = vector.load %arg3[%c0_12, %c1, %c0_13, %c0_14] : memref<1x4x8x128xf32, #tpu.memory_space<vmem>>, vector<1x1x8x128xf32>
    %27 = vector.shape_cast %26 : vector<1x1x8x128xf32> to vector<8x128xf32>
    %c0_15 = arith.constant 0 : index
    %c2 = arith.constant 2 : index
    %c0_16 = arith.constant 0 : index
    %c0_17 = arith.constant 0 : index
    %28 = vector.load %arg3[%c0_15, %c2, %c0_16, %c0_17] : memref<1x4x8x128xf32, #tpu.memory_space<vmem>>, vector<1x1x8x128xf32>
    %29 = vector.shape_cast %28 : vector<1x1x8x128xf32> to vector<8x128xf32>
    %c0_18 = arith.constant 0 : index
    %c3 = arith.constant 3 : index
    %c0_19 = arith.constant 0 : index
    %c0_20 = arith.constant 0 : index
    %30 = vector.load %arg3[%c0_18, %c3, %c0_19, %c0_20] : memref<1x4x8x128xf32, #tpu.memory_space<vmem>>, vector<1x1x8x128xf32>
    %31 = vector.shape_cast %30 : vector<1x1x8x128xf32> to vector<8x128xf32>
    %cst_21 = arith.constant 0.000000e+00 : f32
    %32 = vector.broadcast %cst_21 : f32 to vector<8x128xf32>
    %33 = arith.select %21, %25, %32 : vector<8x128xi1>, vector<8x128xf32>
    %c0_i32_22 = arith.constant 0 : i32
    %34 = vector.broadcast %c0_i32_22 : i32 to vector<8x128xi32>
    %35 = arith.cmpi eq, %23, %34 : vector<8x128xi32>
    %36 = arith.extui %35 : vector<8x128xi1> to vector<8x128xi32>
    %37 = arith.sitofp %36 : vector<8x128xi32> to vector<8x128xf32>
    %38 = arith.mulf %33, %37 : vector<8x128xf32>
    %39 = arith.addf %5, %38 : vector<8x128xf32>
    %40 = arith.addf %5, %37 : vector<8x128xf32>
    %41 = arith.mulf %33, %33 : vector<8x128xf32>
    %42 = arith.addf %5, %41 : vector<8x128xf32>
    %cst_23 = arith.constant 0.000000e+00 : f32
    %43 = vector.broadcast %cst_23 : f32 to vector<8x128xf32>
    %44 = arith.select %21, %27, %43 : vector<8x128xi1>, vector<8x128xf32>
    %c1_i32_24 = arith.constant 1 : i32
    %45 = vector.broadcast %c1_i32_24 : i32 to vector<8x128xi32>
    %46 = arith.cmpi eq, %23, %45 : vector<8x128xi32>
    %47 = arith.extui %46 : vector<8x128xi1> to vector<8x128xi32>
    %48 = arith.sitofp %47 : vector<8x128xi32> to vector<8x128xf32>
    %49 = arith.mulf %44, %48 : vector<8x128xf32>
    %50 = arith.addf %6, %49 : vector<8x128xf32>
    %51 = arith.addf %6, %48 : vector<8x128xf32>
    %52 = arith.mulf %44, %44 : vector<8x128xf32>
    %53 = arith.addf %6, %52 : vector<8x128xf32>
    %cst_25 = arith.constant 0.000000e+00 : f32
    %54 = vector.broadcast %cst_25 : f32 to vector<8x128xf32>
    %55 = arith.select %21, %29, %54 : vector<8x128xi1>, vector<8x128xf32>
    %c2_i32 = arith.constant 2 : i32
    %56 = vector.broadcast %c2_i32 : i32 to vector<8x128xi32>
    %57 = arith.cmpi eq, %23, %56 : vector<8x128xi32>
    %58 = arith.extui %57 : vector<8x128xi1> to vector<8x128xi32>
    %59 = arith.sitofp %58 : vector<8x128xi32> to vector<8x128xf32>
    %60 = arith.mulf %55, %59 : vector<8x128xf32>
    %61 = arith.addf %7, %60 : vector<8x128xf32>
    %62 = arith.addf %7, %59 : vector<8x128xf32>
    %63 = arith.mulf %55, %55 : vector<8x128xf32>
    %64 = arith.addf %7, %63 : vector<8x128xf32>
    %cst_26 = arith.constant 0.000000e+00 : f32
    %65 = vector.broadcast %cst_26 : f32 to vector<8x128xf32>
    %66 = arith.select %21, %31, %65 : vector<8x128xi1>, vector<8x128xf32>
    %c3_i32 = arith.constant 3 : i32
    %67 = vector.broadcast %c3_i32 : i32 to vector<8x128xi32>
    %68 = arith.cmpi eq, %23, %67 : vector<8x128xi32>
    %69 = arith.extui %68 : vector<8x128xi1> to vector<8x128xi32>
    %70 = arith.sitofp %69 : vector<8x128xi32> to vector<8x128xf32>
    %71 = arith.mulf %66, %70 : vector<8x128xf32>
    %72 = arith.addf %8, %71 : vector<8x128xf32>
    %73 = arith.addf %8, %70 : vector<8x128xf32>
    %74 = arith.mulf %66, %66 : vector<8x128xf32>
    %75 = arith.addf %8, %74 : vector<8x128xf32>
    %c0_27 = arith.constant 0 : index
    %c0_28 = arith.constant 0 : index
    %c0_29 = arith.constant 0 : index
    %c0_30 = arith.constant 0 : index
    %c0_31 = arith.constant 0 : index
    %76 = vector.load %arg5[%c0_27, %c0_28, %c0_29, %c0_30, %c0_31] : memref<1x4x3x8x128xf32, #tpu.memory_space<vmem>>, vector<1x1x1x8x128xf32>
    %77 = vector.shape_cast %76 : vector<1x1x1x8x128xf32> to vector<8x128xf32>
    %78 = arith.addf %77, %39 : vector<8x128xf32>
    %c0_32 = arith.constant 0 : index
    %c0_33 = arith.constant 0 : index
    %c0_34 = arith.constant 0 : index
    %c0_35 = arith.constant 0 : index
    %c0_36 = arith.constant 0 : index
    %79 = vector.load %arg5[%c0_32, %c0_33, %c0_34, %c0_35, %c0_36] : memref<1x4x3x8x128xf32, #tpu.memory_space<vmem>>, vector<1x1x1x8x128xf32>
    %80 = vector.shape_cast %79 : vector<1x1x1x8x128xf32> to vector<8x128xf32>
    %81 = vector.shape_cast %78 : vector<8x128xf32> to vector<1x1x1x8x128xf32>
    tpu.vector_store %arg5[%c0_32, %c0_33, %c0_34, %c0_35, %c0_36], %81 {strides = array<i32>} : memref<1x4x3x8x128xf32, #tpu.memory_space<vmem>>, vector<1x1x1x8x128xf32>,
    %c0_37 = arith.constant 0 : index
    %c0_38 = arith.constant 0 : index
    %c1_39 = arith.constant 1 : index
    %c0_40 = arith.constant 0 : index
    %c0_41 = arith.constant 0 : index
    %82 = vector.load %arg5[%c0_37, %c0_38, %c1_39, %c0_40, %c0_41] : memref<1x4x3x8x128xf32, #tpu.memory_space<vmem>>, vector<1x1x1x8x128xf32>
    %83 = vector.shape_cast %82 : vector<1x1x1x8x128xf32> to vector<8x128xf32>
    %84 = arith.addf %83, %40 : vector<8x128xf32>
    %c0_42 = arith.constant 0 : index
    %c0_43 = arith.constant 0 : index
    %c1_44 = arith.constant 1 : index
    %c0_45 = arith.constant 0 : index
    %c0_46 = arith.constant 0 : index
    %85 = vector.load %arg5[%c0_42, %c0_43, %c1_44, %c0_45, %c0_46] : memref<1x4x3x8x128xf32, #tpu.memory_space<vmem>>, vector<1x1x1x8x128xf32>
    %86 = vector.shape_cast %85 : vector<1x1x1x8x128xf32> to vector<8x128xf32>
    %87 = vector.shape_cast %84 : vector<8x128xf32> to vector<1x1x1x8x128xf32>
    tpu.vector_store %arg5[%c0_42, %c0_43, %c1_44, %c0_45, %c0_46], %87 {strides = array<i32>} : memref<1x4x3x8x128xf32, #tpu.memory_space<vmem>>, vector<1x1x1x8x128xf32>,
    %c0_47 = arith.constant 0 : index
    %c0_48 = arith.constant 0 : index
    %c2_49 = arith.constant 2 : index
    %c0_50 = arith.constant 0 : index
    %c0_51 = arith.constant 0 : index
    %88 = vector.load %arg5[%c0_47, %c0_48, %c2_49, %c0_50, %c0_51] : memref<1x4x3x8x128xf32, #tpu.memory_space<vmem>>, vector<1x1x1x8x128xf32>
    %89 = vector.shape_cast %88 : vector<1x1x1x8x128xf32> to vector<8x128xf32>
    %90 = arith.addf %89, %42 : vector<8x128xf32>
    %c0_52 = arith.constant 0 : index
    %c0_53 = arith.constant 0 : index
    %c2_54 = arith.constant 2 : index
    %c0_55 = arith.constant 0 : index
    %c0_56 = arith.constant 0 : index
    %91 = vector.load %arg5[%c0_52, %c0_53, %c2_54, %c0_55, %c0_56] : memref<1x4x3x8x128xf32, #tpu.memory_space<vmem>>, vector<1x1x1x8x128xf32>
    %92 = vector.shape_cast %91 : vector<1x1x1x8x128xf32> to vector<8x128xf32>
    %93 = vector.shape_cast %90 : vector<8x128xf32> to vector<1x1x1x8x128xf32>
    tpu.vector_store %arg5[%c0_52, %c0_53, %c2_54, %c0_55, %c0_56], %93 {strides = array<i32>} : memref<1x4x3x8x128xf32, #tpu.memory_space<vmem>>, vector<1x1x1x8x128xf32>,
    %c0_57 = arith.constant 0 : index
    %c1_58 = arith.constant 1 : index
    %c0_59 = arith.constant 0 : index
    %c0_60 = arith.constant 0 : index
    %c0_61 = arith.constant 0 : index
    %94 = vector.load %arg5[%c0_57, %c1_58, %c0_59, %c0_60, %c0_61] : memref<1x4x3x8x128xf32, #tpu.memory_space<vmem>>, vector<1x1x1x8x128xf32>
    %95 = vector.shape_cast %94 : vector<1x1x1x8x128xf32> to vector<8x128xf32>
    %96 = arith.addf %95, %50 : vector<8x128xf32>
    %c0_62 = arith.constant 0 : index
    %c1_63 = arith.constant 1 : index
    %c0_64 = arith.constant 0 : index
    %c0_65 = arith.constant 0 : index
    %c0_66 = arith.constant 0 : index
    %97 = vector.load %arg5[%c0_62, %c1_63, %c0_64, %c0_65, %c0_66] : memref<1x4x3x8x128xf32, #tpu.memory_space<vmem>>, vector<1x1x1x8x128xf32>
    %98 = vector.shape_cast %97 : vector<1x1x1x8x128xf32> to vector<8x128xf32>
    %99 = vector.shape_cast %96 : vector<8x128xf32> to vector<1x1x1x8x128xf32>
    tpu.vector_store %arg5[%c0_62, %c1_63, %c0_64, %c0_65, %c0_66], %99 {strides = array<i32>} : memref<1x4x3x8x128xf32, #tpu.memory_space<vmem>>, vector<1x1x1x8x128xf32>,
    %c0_67 = arith.constant 0 : index
    %c1_68 = arith.constant 1 : index
    %c1_69 = arith.constant 1 : index
    %c0_70 = arith.constant 0 : index
    %c0_71 = arith.constant 0 : index
    %100 = vector.load %arg5[%c0_67, %c1_68, %c1_69, %c0_70, %c0_71] : memref<1x4x3x8x128xf32, #tpu.memory_space<vmem>>, vector<1x1x1x8x128xf32>
    %101 = vector.shape_cast %100 : vector<1x1x1x8x128xf32> to vector<8x128xf32>
    %102 = arith.addf %101, %51 : vector<8x128xf32>
    %c0_72 = arith.constant 0 : index
    %c1_73 = arith.constant 1 : index
    %c1_74 = arith.constant 1 : index
    %c0_75 = arith.constant 0 : index
    %c0_76 = arith.constant 0 : index
    %103 = vector.load %arg5[%c0_72, %c1_73, %c1_74, %c0_75, %c0_76] : memref<1x4x3x8x128xf32, #tpu.memory_space<vmem>>, vector<1x1x1x8x128xf32>
    %104 = vector.shape_cast %103 : vector<1x1x1x8x128xf32> to vector<8x128xf32>
    %105 = vector.shape_cast %102 : vector<8x128xf32> to vector<1x1x1x8x128xf32>
    tpu.vector_store %arg5[%c0_72, %c1_73, %c1_74, %c0_75, %c0_76], %105 {strides = array<i32>} : memref<1x4x3x8x128xf32, #tpu.memory_space<vmem>>, vector<1x1x1x8x128xf32>,
    %c0_77 = arith.constant 0 : index
    %c1_78 = arith.constant 1 : index
    %c2_79 = arith.constant 2 : index
    %c0_80 = arith.constant 0 : index
    %c0_81 = arith.constant 0 : index
    %106 = vector.load %arg5[%c0_77, %c1_78, %c2_79, %c0_80, %c0_81] : memref<1x4x3x8x128xf32, #tpu.memory_space<vmem>>, vector<1x1x1x8x128xf32>
    %107 = vector.shape_cast %106 : vector<1x1x1x8x128xf32> to vector<8x128xf32>
    %108 = arith.addf %107, %53 : vector<8x128xf32>
    %c0_82 = arith.constant 0 : index
    %c1_83 = arith.constant 1 : index
    %c2_84 = arith.constant 2 : index
    %c0_85 = arith.constant 0 : index
    %c0_86 = arith.constant 0 : index
    %109 = vector.load %arg5[%c0_82, %c1_83, %c2_84, %c0_85, %c0_86] : memref<1x4x3x8x128xf32, #tpu.memory_space<vmem>>, vector<1x1x1x8x128xf32>
    %110 = vector.shape_cast %109 : vector<1x1x1x8x128xf32> to vector<8x128xf32>
    %111 = vector.shape_cast %108 : vector<8x128xf32> to vector<1x1x1x8x128xf32>
    tpu.vector_store %arg5[%c0_82, %c1_83, %c2_84, %c0_85, %c0_86], %111 {strides = array<i32>} : memref<1x4x3x8x128xf32, #tpu.memory_space<vmem>>, vector<1x1x1x8x128xf32>,
    %c0_87 = arith.constant 0 : index
    %c2_88 = arith.constant 2 : index
    %c0_89 = arith.constant 0 : index
    %c0_90 = arith.constant 0 : index
    %c0_91 = arith.constant 0 : index
    %112 = vector.load %arg5[%c0_87, %c2_88, %c0_89, %c0_90, %c0_91] : memref<1x4x3x8x128xf32, #tpu.memory_space<vmem>>, vector<1x1x1x8x128xf32>
    %113 = vector.shape_cast %112 : vector<1x1x1x8x128xf32> to vector<8x128xf32>
    %114 = arith.addf %113, %61 : vector<8x128xf32>
    %c0_92 = arith.constant 0 : index
    %c2_93 = arith.constant 2 : index
    %c0_94 = arith.constant 0 : index
    %c0_95 = arith.constant 0 : index
    %c0_96 = arith.constant 0 : index
    %115 = vector.load %arg5[%c0_92, %c2_93, %c0_94, %c0_95, %c0_96] : memref<1x4x3x8x128xf32, #tpu.memory_space<vmem>>, vector<1x1x1x8x128xf32>
    %116 = vector.shape_cast %115 : vector<1x1x1x8x128xf32> to vector<8x128xf32>
    %117 = vector.shape_cast %114 : vector<8x128xf32> to vector<1x1x1x8x128xf32>
    tpu.vector_store %arg5[%c0_92, %c2_93, %c0_94, %c0_95, %c0_96], %117 {strides = array<i32>} : memref<1x4x3x8x128xf32, #tpu.memory_space<vmem>>, vector<1x1x1x8x128xf32>,
    %c0_97 = arith.constant 0 : index
    %c2_98 = arith.constant 2 : index
    %c1_99 = arith.constant 1 : index
    %c0_100 = arith.constant 0 : index
    %c0_101 = arith.constant 0 : index
    %118 = vector.load %arg5[%c0_97, %c2_98, %c1_99, %c0_100, %c0_101] : memref<1x4x3x8x128xf32, #tpu.memory_space<vmem>>, vector<1x1x1x8x128xf32>
    %119 = vector.shape_cast %118 : vector<1x1x1x8x128xf32> to vector<8x128xf32>
    %120 = arith.addf %119, %62 : vector<8x128xf32>
    %c0_102 = arith.constant 0 : index
    %c2_103 = arith.constant 2 : index
    %c1_104 = arith.constant 1 : index
    %c0_105 = arith.constant 0 : index
    %c0_106 = arith.constant 0 : index
    %121 = vector.load %arg5[%c0_102, %c2_103, %c1_104, %c0_105, %c0_106] : memref<1x4x3x8x128xf32, #tpu.memory_space<vmem>>, vector<1x1x1x8x128xf32>
    %122 = vector.shape_cast %121 : vector<1x1x1x8x128xf32> to vector<8x128xf32>
    %123 = vector.shape_cast %120 : vector<8x128xf32> to vector<1x1x1x8x128xf32>
    tpu.vector_store %arg5[%c0_102, %c2_103, %c1_104, %c0_105, %c0_106], %123 {strides = array<i32>} : memref<1x4x3x8x128xf32, #tpu.memory_space<vmem>>, vector<1x1x1x8x128xf32>,
    %c0_107 = arith.constant 0 : index
    %c2_108 = arith.constant 2 : index
    %c2_109 = arith.constant 2 : index
    %c0_110 = arith.constant 0 : index
    %c0_111 = arith.constant 0 : index
    %124 = vector.load %arg5[%c0_107, %c2_108, %c2_109, %c0_110, %c0_111] : memref<1x4x3x8x128xf32, #tpu.memory_space<vmem>>, vector<1x1x1x8x128xf32>
    %125 = vector.shape_cast %124 : vector<1x1x1x8x128xf32> to vector<8x128xf32>
    %126 = arith.addf %125, %64 : vector<8x128xf32>
    %c0_112 = arith.constant 0 : index
    %c2_113 = arith.constant 2 : index
    %c2_114 = arith.constant 2 : index
    %c0_115 = arith.constant 0 : index
    %c0_116 = arith.constant 0 : index
    %127 = vector.load %arg5[%c0_112, %c2_113, %c2_114, %c0_115, %c0_116] : memref<1x4x3x8x128xf32, #tpu.memory_space<vmem>>, vector<1x1x1x8x128xf32>
    %128 = vector.shape_cast %127 : vector<1x1x1x8x128xf32> to vector<8x128xf32>
    %129 = vector.shape_cast %126 : vector<8x128xf32> to vector<1x1x1x8x128xf32>
    tpu.vector_store %arg5[%c0_112, %c2_113, %c2_114, %c0_115, %c0_116], %129 {strides = array<i32>} : memref<1x4x3x8x128xf32, #tpu.memory_space<vmem>>, vector<1x1x1x8x128xf32>,
    %c0_117 = arith.constant 0 : index
    %c3_118 = arith.constant 3 : index
    %c0_119 = arith.constant 0 : index
    %c0_120 = arith.constant 0 : index
    %c0_121 = arith.constant 0 : index
    %130 = vector.load %arg5[%c0_117, %c3_118, %c0_119, %c0_120, %c0_121] : memref<1x4x3x8x128xf32, #tpu.memory_space<vmem>>, vector<1x1x1x8x128xf32>
    %131 = vector.shape_cast %130 : vector<1x1x1x8x128xf32> to vector<8x128xf32>
    %132 = arith.addf %131, %72 : vector<8x128xf32>
    %c0_122 = arith.constant 0 : index
    %c3_123 = arith.constant 3 : index
    %c0_124 = arith.constant 0 : index
    %c0_125 = arith.constant 0 : index
    %c0_126 = arith.constant 0 : index
    %133 = vector.load %arg5[%c0_122, %c3_123, %c0_124, %c0_125, %c0_126] : memref<1x4x3x8x128xf32, #tpu.memory_space<vmem>>, vector<1x1x1x8x128xf32>
    %134 = vector.shape_cast %133 : vector<1x1x1x8x128xf32> to vector<8x128xf32>
    %135 = vector.shape_cast %132 : vector<8x128xf32> to vector<1x1x1x8x128xf32>
    tpu.vector_store %arg5[%c0_122, %c3_123, %c0_124, %c0_125, %c0_126], %135 {strides = array<i32>} : memref<1x4x3x8x128xf32, #tpu.memory_space<vmem>>, vector<1x1x1x8x128xf32>,
    %c0_127 = arith.constant 0 : index
    %c3_128 = arith.constant 3 : index
    %c1_129 = arith.constant 1 : index
    %c0_130 = arith.constant 0 : index
    %c0_131 = arith.constant 0 : index
    %136 = vector.load %arg5[%c0_127, %c3_128, %c1_129, %c0_130, %c0_131] : memref<1x4x3x8x128xf32, #tpu.memory_space<vmem>>, vector<1x1x1x8x128xf32>
    %137 = vector.shape_cast %136 : vector<1x1x1x8x128xf32> to vector<8x128xf32>
    %138 = arith.addf %137, %73 : vector<8x128xf32>
    %c0_132 = arith.constant 0 : index
    %c3_133 = arith.constant 3 : index
    %c1_134 = arith.constant 1 : index
    %c0_135 = arith.constant 0 : index
    %c0_136 = arith.constant 0 : index
    %139 = vector.load %arg5[%c0_132, %c3_133, %c1_134, %c0_135, %c0_136] : memref<1x4x3x8x128xf32, #tpu.memory_space<vmem>>, vector<1x1x1x8x128xf32>
    %140 = vector.shape_cast %139 : vector<1x1x1x8x128xf32> to vector<8x128xf32>
    %141 = vector.shape_cast %138 : vector<8x128xf32> to vector<1x1x1x8x128xf32>
    tpu.vector_store %arg5[%c0_132, %c3_133, %c1_134, %c0_135, %c0_136], %141 {strides = array<i32>} : memref<1x4x3x8x128xf32, #tpu.memory_space<vmem>>, vector<1x1x1x8x128xf32>,
    %c0_137 = arith.constant 0 : index
    %c3_138 = arith.constant 3 : index
    %c2_139 = arith.constant 2 : index
    %c0_140 = arith.constant 0 : index
    %c0_141 = arith.constant 0 : index
    %142 = vector.load %arg5[%c0_137, %c3_138, %c2_139, %c0_140, %c0_141] : memref<1x4x3x8x128xf32, #tpu.memory_space<vmem>>, vector<1x1x1x8x128xf32>
    %143 = vector.shape_cast %142 : vector<1x1x1x8x128xf32> to vector<8x128xf32>
    %144 = arith.addf %143, %75 : vector<8x128xf32>
    %c0_142 = arith.constant 0 : index
    %c3_143 = arith.constant 3 : index
    %c2_144 = arith.constant 2 : index
    %c0_145 = arith.constant 0 : index
    %c0_146 = arith.constant 0 : index
    %145 = vector.load %arg5[%c0_142, %c3_143, %c2_144, %c0_145, %c0_146] : memref<1x4x3x8x128xf32, #tpu.memory_space<vmem>>, vector<1x1x1x8x128xf32>
    %146 = vector.shape_cast %145 : vector<1x1x1x8x128xf32> to vector<8x128xf32>
    %147 = vector.shape_cast %144 : vector<8x128xf32> to vector<1x1x1x8x128xf32>
    tpu.vector_store %arg5[%c0_142, %c3_143, %c2_144, %c0_145, %c0_146], %147 {strides = array<i32>} : memref<1x4x3x8x128xf32, #tpu.memory_space<vmem>>, vector<1x1x1x8x128xf32>,
    return
  }
  func.func @transform_0(%arg0: i32, %arg1: i32, %arg2: i32) -> (i32, i32, i32, i32) {
    %c1_i32 = arith.constant 1 : i32
    %0 = arith.muli %arg1, %c1_i32 : i32
    %1 = arith.addi %0, %arg2 : i32
    %c0_i32 = arith.constant 0 : i32
    %c0_i32_0 = arith.constant 0 : i32
    %c0_i32_1 = arith.constant 0 : i32
    return %arg0, %c0_i32, %1, %c0_i32_0 : i32, i32, i32, i32
  }
  func.func @transform_1(%arg0: i32, %arg1: i32, %arg2: i32) -> (i32, i32, i32, i32) {
    %c1_i32 = arith.constant 1 : i32
    %0 = arith.muli %arg1, %c1_i32 : i32
    %1 = arith.addi %0, %arg2 : i32
    %c0_i32 = arith.constant 0 : i32
    %c0_i32_0 = arith.constant 0 : i32
    %c0_i32_1 = arith.constant 0 : i32
    return %arg0, %c0_i32, %1, %c0_i32_0 : i32, i32, i32, i32
  }
  func.func @transform_2(%arg0: i32, %arg1: i32, %arg2: i32) -> (i32, i32, i32, i32, i32) {
    %c1_i32 = arith.constant 1 : i32
    %0 = arith.muli %arg0, %c1_i32 : i32
    %1 = arith.addi %0, %arg1 : i32
    %c0_i32 = arith.constant 0 : i32
    %c0_i32_0 = arith.constant 0 : i32
    %c0_i32_1 = arith.constant 0 : i32
    %c0_i32_2 = arith.constant 0 : i32
    %c0_i32_3 = arith.constant 0 : i32
    return %1, %c0_i32, %c0_i32_0, %c0_i32_1, %c0_i32_2 : i32, i32, i32, i32, i32
  }
}

</mosaic_0001>

<llo_original>
// kernel: dice_loss.1
$region0: #{dice_loss.1}
  #allocation0 [shape = 'u32[]', space=smem, size = 0x4, offset = 0x4, fixed_abs, tag = 'smem constant byte address 0x4 - core index']
  #allocation1 [shape = 'u32[144,128]{1,0:T(1,128)}', space=vmem, size = 0x12000, scoped, tag = 'internal scratch']
  %s0 = inlined_call_operand.vmem [shape: f32[2,4,8,128], index: 0, kind: input, shape index: {}]
  %s1 = inlined_call_operand.vmem [shape: s32[2,1,8,128], index: 1, kind: input, shape index: {}]
  %s2 = inlined_call_operand.vmem [shape: f32[2,4,3,8,128], index: 2, kind: output, shape index: {}]
  %s3 = sld [smem:[#allocation0]]
  $region45: #{dice_loss.1} parent=0
    _
  %s5 = ssub.s32 1, %s3
  %s6 = scalar_select 0, %s5, %s3
  loop: start=0, step=1, limit=4
  $region2: #{dice_loss.1} parent=0 // loop_pre_header
    _
  $region3: #{dice_loss.1} parent=0 // loop_header
    %s8 = sphi 0, %s12
    %p9 = scmp.ge.s32.totalorder %s8, 4
    %s15 = sphi 0, %s34
    %s16 = sphi 0, %s30
    %s17 = sphi 0, %s26
    %s18 = sphi 0, %s15
    %s19 = sphi 0, %s16
    %s20 = sphi 0, %s17
    %s21 = sphi 0, %s18
    %s22 = sphi 0, %s19
    %s23 = sphi 0, %s20
    %s41 = sphi 0, %s43
    %s44 = sphi 0, %s41
    %s45 = sphi 0, %s44
    %s61 = sphi 0, %s45
    %s71 = sphi 0, %s73
    %s74 = sphi 0, %s71
    %s75 = sphi 0, %s74
    %s91 = sphi 0, %s75
    %s99 = sphi 0, %s101
    %s102 = sphi 0, %s99
    %s103 = sphi 0, %s102
    %s119 = sphi 0, %s103
  $region4: #{dice_loss.1} parent=0 // loop_header_branch
    %11 = sbr.rel (%p9) target = $region8
  $region5: #{dice_loss.1} parent=0 // loop_body
    %s13 = ssub.s32 %s8, 1
    %s14 = ssub.s32 %s8, 2
    %s24 = sadd.s32 1, %s17
    %p25 = scmp.ge.s32.totalorder %s24, 1
    %s26 = scalar_select %p25, 0, %s24
    %s27 = sadd.s32 1, %s16
    %s28 = scalar_select %p25, %s27, %s16
    %p29 = scmp.ge.s32.totalorder %s28, 1
    %s30 = scalar_select %p29, 0, %s28
    %s31 = sadd.s32 1, %s15
    %s32 = scalar_select %p29, %s31, %s15
    %p33 = scmp.ge.s32.totalorder %s32, 2
    %s34 = scalar_select %p33, 0, %s32
    %s35 = sadd.s32 %s16, %s17
    %s36 = sadd.s32 %s30, %s26
    %s37 = ssub.s32 %s15, %s34
    %s38 = ssub.s32 %s35, %s36
    %s39 = sor.u32 %s37, %s38
    %p40 = scmp.eq.s32.totalorder %s39, 0
    %s42 = sadd.s32 %s41, 1
    %s43 = scalar_select %p40, %s41, %s42
    %p46 = pneg %p40
    %p47 = scmp.eq.s32.totalorder %s8, 1
    %p48 = por %p46, %p47
    %p49 = scmp.ne.s32.totalorder %s41, %s44
    %p50 = scmp.eq.s32.totalorder %s8, 0
    %p51 = por %p49, %p50
    %p52 = scmp.ne.s32.totalorder %s41, %s44
    %p53 = scmp.eq.s32.totalorder %s13, 1
    %p54 = por %p52, %p53
    %p55 = scmp.ne.s32.totalorder %s44, %s45
    %p56 = scmp.eq.s32.totalorder %s13, 0
    %p57 = por %p55, %p56
    %p58 = scmp.ne.s32.totalorder %s44, %s45
    %p59 = scmp.eq.s32.totalorder %s14, 1
    %p60 = por %p58, %p59
    %p62 = scmp.ne.s32.totalorder %s45, %s61
    %p63 = scmp.eq.s32.totalorder %s14, 0
    %p64 = por %p62, %p63
    %s65 = sadd.s32 %s16, %s17
    %s66 = sadd.s32 %s30, %s26
    %s67 = ssub.s32 %s15, %s34
    %s68 = ssub.s32 %s65, %s66
    %s69 = sor.u32 %s67, %s68
    %p70 = scmp.eq.s32.totalorder %s69, 0
    %s72 = sadd.s32 %s71, 1
    %s73 = scalar_select %p70, %s71, %s72
    %p76 = pneg %p70
    %p77 = scmp.eq.s32.totalorder %s8, 1
    %p78 = por %p76, %p77
    %p79 = scmp.ne.s32.totalorder %s71, %s74
    %p80 = scmp.eq.s32.totalorder %s8, 0
    %p81 = por %p79, %p80
    %p82 = scmp.ne.s32.totalorder %s71, %s74
    %p83 = scmp.eq.s32.totalorder %s13, 1
    %p84 = por %p82, %p83
    %p85 = scmp.ne.s32.totalorder %s74, %s75
    %p86 = scmp.eq.s32.totalorder %s13, 0
    %p87 = por %p85, %p86
    %p88 = scmp.ne.s32.totalorder %s74, %s75
    %p89 = scmp.eq.s32.totalorder %s14, 1
    %p90 = por %p88, %p89
    %p92 = scmp.ne.s32.totalorder %s75, %s91
    %p93 = scmp.eq.s32.totalorder %s14, 0
    %p94 = por %p92, %p93
    %s95 = sadd.s32 %s15, %s16
    %s96 = sadd.s32 %s34, %s30
    %s97 = ssub.s32 %s95, %s96
    %p98 = scmp.eq.s32.totalorder %s97, 0
    %s100 = sadd.s32 %s99, 1
    %s101 = scalar_select %p98, %s99, %s100
    %p104 = pneg %p98
    %p105 = scmp.eq.s32.totalorder %s8, 1
    %p106 = por %p104, %p105
    %p107 = scmp.ne.s32.totalorder %s99, %s102
    %p108 = scmp.eq.s32.totalorder %s8, 0
    %p109 = por %p107, %p108
    %p110 = scmp.ne.s32.totalorder %s99, %s102
    %p111 = scmp.eq.s32.totalorder %s13, 1
    %p112 = por %p110, %p111
    %p113 = scmp.ne.s32.totalorder %s102, %s103
    %p114 = scmp.eq.s32.totalorder %s13, 0
    %p115 = por %p113, %p114
    %p116 = scmp.ne.s32.totalorder %s102, %s103
    %p117 = scmp.eq.s32.totalorder %s14, 1
    %p118 = por %p116, %p117
    %p120 = scmp.ne.s32.totalorder %s103, %s119
    %p121 = scmp.eq.s32.totalorder %s14, 0
    %p122 = por %p120, %p121
    %p123 = scmp.le.s32.totalorder 1, %s8
    %p124 = scmp.lt.s32.totalorder %s8, 3
    %p125 = pnand %p123, %p124
    %p126 = pneg %p125
    // Predicated region
    $region9: #{dice_loss.1} parent=5 // pred_check
      _
    $region10: #{dice_loss.1} parent=5 // pred_check_branch
      %128 = sbr.rel (%p125) target = $region12
    $region11: #{dice_loss.1} parent=5 // pred_region
      %s129 = ssub.s32 %s8, 1
    $region12: #{dice_loss.1} parent=5 // pred_fallthru
      _
    %p130 = scmp.lt.s32.totalorder %s8, 2
    // Predicated region
    $region13: #{dice_loss.1} parent=5 // pred_check
      %p131 = pneg %p130
    $region14: #{dice_loss.1} parent=5 // pred_check_branch
      %133 = sbr.rel (%p131) target = $region16
    $region15: #{dice_loss.1} parent=5 // pred_region
      // Predicated region
      $region17: #{dice_loss.1} parent=15 // pred_check
        %p134 = pneg %p51
      $region18: #{dice_loss.1} parent=15 // pred_check_branch
        %136 = sbr.rel (%p134) target = $region20
      $region19: #{dice_loss.1} parent=15 // pred_region
        %s137 = sadd.s32 %s16, %s17
        %p138 = scmp.lt.s32.totalorder %s15, 1
        %s139 = scalar_select %p138, %s15, 1
        %p140 = scmp.lt.s32.totalorder %s137, 0
        %s141 = scalar_select %p140, %s137, 0
        %s142 = smul.addr %s139, 4
        %s143 = sadd.s32 %s141, %s142
        %s144 = smul.addr %s143, 8
        %s145 = scalar_lea.vmem %s0, %s144
        %s146 = sadd.s32 %s16, %s17
      $region20: #{dice_loss.1} parent=15 // pred_fallthru
        _
      // Predicated region
      $region21: #{dice_loss.1} parent=15 // pred_check
        %p147 = pneg %p81
      $region22: #{dice_loss.1} parent=15 // pred_check_branch
        %149 = sbr.rel (%p147) target = $region24
      $region23: #{dice_loss.1} parent=15 // pred_region
        %s150 = sadd.s32 %s16, %s17
        %p151 = scmp.lt.s32.totalorder %s15, 1
        %s152 = scalar_select %p151, %s15, 1
        %p153 = scmp.lt.s32.totalorder %s150, 0
        %s154 = scalar_select %p153, %s150, 0
        %s155 = sadd.s32 %s154, %s152
        %s156 = smul.addr %s155, 8
        %s157 = scalar_lea.vmem %s1, %s156
        %s158 = sadd.s32 %s16, %s17
      $region24: #{dice_loss.1} parent=15 // pred_fallthru
        _
    $region16: #{dice_loss.1} parent=5 // pred_fallthru
      _
    %p159 = scmp.le.s32.totalorder 1, %s8
    %p160 = scmp.lt.s32.totalorder %s8, 3
    %p161 = pnand %p159, %p160
    %p162 = pneg %p161
    // Predicated region
    $region25: #{dice_loss.1} parent=5 // pred_check
      _
    $region26: #{dice_loss.1} parent=5 // pred_check_branch
      %164 = sbr.rel (%p161) target = $region28
    $region27: #{dice_loss.1} parent=5 // pred_region
      %s165 = ssub.s32 %s8, 1
      %s166 = sadd.s32 %s19, %s20
      %p167 = scmp.lt.s32.totalorder %s18, 1
      %s168 = scalar_select %p167, %s18, 1
      %p169 = scmp.lt.s32.totalorder %s166, 0
      %s170 = scalar_select %p169, %s166, 0
      %s171 = smul.addr %s168, 4
      %s172 = sadd.s32 %s170, %s171
      %s173 = smul.addr %s172, 8
      %s174 = scalar_lea.vmem %s0, %s173
      %p175 = pneg %p57
      %p176 = pneg %p54
      %s177 = sadd.s32 %s19, %s20
      %p178 = scmp.lt.s32.totalorder %s18, 1
      %s179 = scalar_select %p178, %s18, 1
      %p180 = scmp.lt.s32.totalorder %s177, 0
      %s181 = scalar_select %p180, %s177, 0
      %s182 = sadd.s32 %s181, %s179
      %s183 = smul.addr %s182, 8
      %s184 = scalar_lea.vmem %s1, %s183
      %p185 = pneg %p87
      %p186 = pneg %p84
      %p187 = pneg %p115
      %p188 = pneg %p112
      %s189 = sadd.s32 %s18, %s19
      %p190 = scmp.lt.s32.totalorder %s189, 1
      %s191 = scalar_select %p190, %s189, 1
      %s192 = smul.addr %s191, 12
      %s193 = smul.addr %s192, 8
      %s194 = scalar_lea.vmem %s2, %s193
      %s195 = sadd.s32 %s19, %s20
      %p196 = scmp.lt.s32.totalorder %s18, 1
      %s197 = scalar_select %p196, %s18, 1
      %p198 = scmp.lt.s32.totalorder %s195, 0
      %s199 = scalar_select %p198, %s195, 0
      %s200 = smul.addr %s197, 4
      %s201 = sadd.s32 %s199, %s200
      %s202 = smul.addr %s201, 8
      %s203 = scalar_lea.vmem %s0, %s202
      %s204 = sadd.s32 %s19, %s20
      %s205 = sadd.s32 %s19, %s20
      %p206 = scmp.lt.s32.totalorder %s18, 1
      %s207 = scalar_select %p206, %s18, 1
      %p208 = scmp.lt.s32.totalorder %s205, 0
      %s209 = scalar_select %p208, %s205, 0
      %s210 = sadd.s32 %s209, %s207
      %s211 = smul.addr %s210, 8
      %s212 = scalar_lea.vmem %s1, %s211
      %s213 = sadd.s32 %s19, %s20
      %s214 = sadd.s32 %s18, %s19
      %p215 = scmp.lt.s32.totalorder %s214, 1
      %s216 = scalar_select %p215, %s214, 1
      %s217 = smul.addr %s216, 12
      %s218 = smul.addr %s217, 8
      %s219 = scalar_lea.vmem %s2, %s218
      %s220 = sadd.s32 %s18, %s19
      %s221 = sadd.s32 %s19, %s20
      %p222 = scmp.eq.s32.totalorder %s20, 0
      // Predicated region
      $region29: #{dice_loss.1} parent=27 // pred_check
        %p223 = pneg %p222
      $region30: #{dice_loss.1} parent=27 // pred_check_branch
        %225 = sbr.rel (%p223) target = $region32
      $region31: #{dice_loss.1} parent=27 // pred_region
        %226 = vst [vmem:[%s219] sm:$0xff] 0.0
        %227 = vst [vmem:[%s219 + $0x8] sm:$0xff] 0.0
        %228 = vst [vmem:[%s219 + $0x10] sm:$0xff] 0.0
        %229 = vst [vmem:[%s219 + $0x18] sm:$0xff] 0.0
        %230 = vst [vmem:[%s219 + $0x20] sm:$0xff] 0.0
        %231 = vst [vmem:[%s219 + $0x28] sm:$0xff] 0.0
        %232 = vst [vmem:[%s219 + $0x30] sm:$0xff] 0.0
        %233 = vst [vmem:[%s219 + $0x38] sm:$0xff] 0.0
        %234 = vst [vmem:[%s219 + $0x40] sm:$0xff] 0.0
        %235 = vst [vmem:[%s219 + $0x48] sm:$0xff] 0.0
        %236 = vst [vmem:[%s219 + $0x50] sm:$0xff] 0.0
        %237 = vst [vmem:[%s219 + $0x58] sm:$0xff] 0.0
      $region32: #{dice_loss.1} parent=27 // pred_fallthru
        _
      %v238 = vld [vmem:[%s212] sm:$0xff]
      %v239 = vlaneseq
      %v240 = vshrl.u32 %v239, 7
      %v241 = vlaneseq
      %v242 = vand.u32 %v241, 127
      %s243 = smul.u32 %s221, 8
      %v244 = vstv %s243
      %v245 = vadd.s32 %v244, %v240
      %v246 = vmul.u32 %v245, 128
      %v247 = vadd.s32 %v246, %v242
      %vm248 = vcmp.lt.s32.totalorder %v247, 256
      %v249 = vsel %vm248, %v238, 4294967295
      %v250 = vld [vmem:[%s203] sm:$0xff]
      %s251 = scalar_lea.vmem %s203, 8
      %v252 = vld [vmem:[%s251] sm:$0xff]
      %s253 = scalar_lea.vmem %s203, 16
      %v254 = vld [vmem:[%s253] sm:$0xff]
      %s255 = scalar_lea.vmem %s203, 24
      %v256 = vld [vmem:[%s255] sm:$0xff]
      %v257 = vsel %vm248, %v250, 0.0
      %vm258 = vcmp.eq.s32.totalorder %v249, 0
      %v259 = vsel %vm258, 1, 0
      %v260 = vcvt.s32.f32 %v259
      %v261 = vmul.f32 %v257, %v260
      %v262 = vadd.f32 %v261, 0.0
      %v263 = vadd.f32 %v260, 0.0
      %v264 = vmul.f32 %v257, %v257
      %v265 = vadd.f32 %v264, 0.0
      %v266 = vsel %vm248, %v252, 0.0
      %vm267 = vcmp.eq.s32.totalorder %v249, 1
      %v268 = vsel %vm267, 1, 0
      %v269 = vcvt.s32.f32 %v268
      %v270 = vmul.f32 %v266, %v269
      %v271 = vadd.f32 %v270, 0.0
      %v272 = vadd.f32 %v269, 0.0
      %v273 = vmul.f32 %v266, %v266
      %v274 = vadd.f32 %v273, 0.0
      %v275 = vsel %vm248, %v254, 0.0
      %vm276 = vcmp.eq.s32.totalorder %v249, 2
      %v277 = vsel %vm276, 1, 0
      %v278 = vcvt.s32.f32 %v277
      %v279 = vmul.f32 %v275, %v278
      %v280 = vadd.f32 %v279, 0.0
      %v281 = vadd.f32 %v278, 0.0
      %v282 = vmul.f32 %v275, %v275
      %v283 = vadd.f32 %v282, 0.0
      %v284 = vsel %vm248, %v256, 0.0
      %vm285 = vcmp.eq.s32.totalorder %v249, 3
      %v286 = vsel %vm285, 1, 0
      %v287 = vcvt.s32.f32 %v286
      %v288 = vmul.f32 %v284, %v287
      %v289 = vadd.f32 %v288, 0.0
      %v290 = vadd.f32 %v287, 0.0
      %v291 = vmul.f32 %v284, %v284
      %v292 = vadd.f32 %v291, 0.0
      %v293 = vld [vmem:[%s219] sm:$0xff]
      %v294 = vadd.f32 %v293, %v262
      %295 = vst [vmem:[%s219] sm:$0xff] %v294
      %s296 = scalar_lea.vmem %s219, 8
      %v297 = vld [vmem:[%s296] sm:$0xff]
      %v298 = vadd.f32 %v297, %v263
      %299 = vst [vmem:[%s296] sm:$0xff] %v298
      %s300 = scalar_lea.vmem %s219, 16
      %v301 = vld [vmem:[%s300] sm:$0xff]
      %v302 = vadd.f32 %v301, %v265
      %303 = vst [vmem:[%s300] sm:$0xff] %v302
      %s304 = scalar_lea.vmem %s219, 24
      %v305 = vld [vmem:[%s304] sm:$0xff]
      %v306 = vadd.f32 %v305, %v271
      %307 = vst [vmem:[%s304] sm:$0xff] %v306
      %s308 = scalar_lea.vmem %s219, 32
      %v309 = vld [vmem:[%s308] sm:$0xff]
      %v310 = vadd.f32 %v309, %v272
      %311 = vst [vmem:[%s308] sm:$0xff] %v310
      %s312 = scalar_lea.vmem %s219, 40
      %v313 = vld [vmem:[%s312] sm:$0xff]
      %v314 = vadd.f32 %v313, %v274
      %315 = vst [vmem:[%s312] sm:$0xff] %v314
      %s316 = scalar_lea.vmem %s219, 48
      %v317 = vld [vmem:[%s316] sm:$0xff]
      %v318 = vadd.f32 %v317, %v280
      %319 = vst [vmem:[%s316] sm:$0xff] %v318
      %s320 = scalar_lea.vmem %s219, 56
      %v321 = vld [vmem:[%s320] sm:$0xff]
      %v322 = vadd.f32 %v321, %v281
      %323 = vst [vmem:[%s320] sm:$0xff] %v322
      %s324 = scalar_lea.vmem %s219, 64
      %v325 = vld [vmem:[%s324] sm:$0xff]
      %v326 = vadd.f32 %v325, %v283
      %327 = vst [vmem:[%s324] sm:$0xff] %v326
      %s328 = scalar_lea.vmem %s219, 72
      %v329 = vld [vmem:[%s328] sm:$0xff]
      %v330 = vadd.f32 %v329, %v289
      %331 = vst [vmem:[%s328] sm:$0xff] %v330
      %s332 = scalar_lea.vmem %s219, 80
      %v333 = vld [vmem:[%s332] sm:$0xff]
      %v334 = vadd.f32 %v333, %v290
      %335 = vst [vmem:[%s332] sm:$0xff] %v334
      %s336 = scalar_lea.vmem %s219, 88
      %v337 = vld [vmem:[%s336] sm:$0xff]
      %v338 = vadd.f32 %v337, %v292
      %339 = vst [vmem:[%s336] sm:$0xff] %v338
      %s340 = sadd.s32 %s18, %s19
      %p341 = scmp.lt.s32.totalorder %s340, 1
      %s342 = scalar_select %p341, %s340, 1
      %s343 = smul.addr %s342, 12
      %s344 = smul.addr %s343, 8
      %s345 = scalar_lea.vmem %s2, %s344
      // Predicated region
      $region33: #{dice_loss.1} parent=27 // pred_check
        %p346 = pneg %p112
      $region34: #{dice_loss.1} parent=27 // pred_check_branch
        %348 = sbr.rel (%p346) target = $region36
      $region35: #{dice_loss.1} parent=27 // pred_region
        %s349 = sadd.s32 %s18, %s19
      $region36: #{dice_loss.1} parent=27 // pred_fallthru
        _
    $region28: #{dice_loss.1} parent=5 // pred_fallthru
      _
    %p350 = scmp.le.s32.totalorder 2, %s8
    // Predicated region
    $region37: #{dice_loss.1} parent=5 // pred_check
      %p351 = pneg %p350
    $region38: #{dice_loss.1} parent=5 // pred_check_branch
      %353 = sbr.rel (%p351) target = $region40
    $region39: #{dice_loss.1} parent=5 // pred_region
      %s354 = ssub.s32 %s8, 2
      // Predicated region
      $region41: #{dice_loss.1} parent=39 // pred_check
        %p355 = pneg %p118
      $region42: #{dice_loss.1} parent=39 // pred_check_branch
        %357 = sbr.rel (%p355) target = $region44
      $region43: #{dice_loss.1} parent=39 // pred_region
        %s358 = sadd.s32 %s21, %s22
        %p359 = scmp.lt.s32.totalorder %s358, 1
        %s360 = scalar_select %p359, %s358, 1
        %s361 = smul.addr %s360, 12
        %s362 = smul.addr %s361, 8
        %s363 = scalar_lea.vmem %s2, %s362
      $region44: #{dice_loss.1} parent=39 // pred_fallthru
        _
    $region40: #{dice_loss.1} parent=5 // pred_fallthru
      _
  $region6: #{dice_loss.1} parent=0 // loop_footer
    %s12 = sadd.s32 1, %s8
  $region7: #{dice_loss.1} parent=0 // loop_footer_branch
    %7 = sbr.rel target = $region3
  $region8: #{dice_loss.1} parent=0 // loop_exit
    _

</llo_original>
